<compile_context>
chip_gen: v7x
topology: tpu7x:2x2x1
jax: 0.10.0
libtpu: 0.0.40
codegen_flags: <defaults>
</compile_context>

<pallas_src>
import functools

import jax
import jax.numpy as jnp
from jax.experimental import pallas as pl
from jax.experimental.pallas import tpu as pltpu


class RandomIoUCrop:
    def __init__(self,
                 min_scale: float = 0.3,
                 max_scale: float = 1.0,
                 min_aspect_ratio: float = 0.5,
                 max_aspect_ratio: float = 2.0,
                 sampler_options=None,
                 trials: int = 40):
        self.min_scale = min_scale
        self.max_scale = max_scale
        self.min_aspect_ratio = min_aspect_ratio
        self.max_aspect_ratio = max_aspect_ratio
        if sampler_options is None:
            sampler_options = [0.0, 0.1, 0.3, 0.5, 0.7, 0.9, 1.0]
        self.options = sampler_options
        self.trials = trials

    # ------------------------------------------------------------------ #
    # Pallas kernel 1: IoU over all trials + in-kernel trial selection    #
    # ------------------------------------------------------------------ #
    def _iou_select_kernel(self, boxes_ref, crops_ref, scal_ref, meta_ref, *,
                           width, height):
        # boxes_ref : (8, Np) f32  rows 0-3 = x1,y1,x2,y2 ; row 4 = lane validity
        # crops_ref : (4, T, 1) f32  rows = [left, top, right, bottom] per trial
        # scal_ref  : (1,) f32 SMEM  [min_iou]
        # meta_ref  : (8, Np) f32  rows 0-3 adjusted boxes, 4 keep mask,
        #             5 apply flag, 6 (lanes 0-3) selected crop [l,t,r,b], 7 pad
        min_iou = scal_ref[0]

        crops = crops_ref[...]                         # (4, T, 1)
        lv = crops[0]                                  # (T, 1)
        tv = crops[1]
        rv = crops[2]
        bv = crops[3]
        T = lv.shape[0]
        Np = meta_ref.shape[1]
        CH = 128                                       # box-chunk width (lanes)
        n_chunks = Np // CH

        new_w = rv - lv                                # (T, 1)
        new_h = bv - tv
        area_crop = new_w * new_h
        # aspect-ratio + degenerate-crop checks, division-free (exact thresholds)
        aspect_ok = ((new_w >= self.min_aspect_ratio * new_h)
                     & (new_w <= self.max_aspect_ratio * new_h)
                     & (new_w >= 1.0) & (new_h >= 1.0))

        # ---- pass A: reduce over 128-lane box chunks (bounds vreg pressure) --
        any_within_f = jnp.zeros((T, 1), jnp.float32)
        iou_ok_f = jnp.zeros((T, 1), jnp.float32)
        for c in range(n_chunks):
            sl = slice(c * CH, (c + 1) * CH)
            blk = boxes_ref[:, sl]                     # (8, CH)
            x1 = blk[0:1]; y1 = blk[1:2]; x2 = blk[2:3]; y2 = blk[3:4]
            bm = blk[4:5] > 0.5
            cx = 0.5 * (x1 + x2)
            cy = 0.5 * (y1 + y2)
            # center strictly inside crop (torchvision semantics), pad lanes off
            within = (lv < cx) & (cx < rv) & (tv < cy) & (cy < bv) & bm
            iw = jnp.maximum(jnp.minimum(x2, rv) - jnp.maximum(x1, lv), 0.0)
            ih = jnp.maximum(jnp.minimum(y2, bv) - jnp.maximum(y1, tv), 0.0)
            inter = iw * ih
            union = (x2 - x1) * (y2 - y1) + area_crop - inter
            # iou >= min_iou  <=>  inter >= min_iou * union  (union > 0); exact
            ok = within & (inter >= min_iou * union)
            any_within_f = jnp.maximum(
                any_within_f,
                jnp.max(within.astype(jnp.float32), axis=1, keepdims=True))
            iou_ok_f = jnp.maximum(
                iou_ok_f,
                jnp.max(ok.astype(jnp.float32), axis=1, keepdims=True))

        valid = aspect_ok & (any_within_f > 0.5) & (iou_ok_f > 0.5)     # (T, 1)

        # ---- first-valid-trial selection (vectorized float argmin) ----------
        trial_idx = jax.lax.broadcasted_iota(jnp.int32, (T, 1), 0).astype(jnp.float32)
        sel_f = jnp.min(jnp.where(valid, trial_idx, jnp.float32(T)),
                        axis=0, keepdims=True)                          # (1, 1)
        any_valid = sel_f < jnp.float32(T)                              # (1, 1)
        onehot = ((trial_idx == sel_f) & valid).astype(jnp.float32)     # (T, 1)

        l_sel = jnp.sum(lv * onehot, axis=0, keepdims=True)             # (1, 1)
        t_sel = jnp.sum(tv * onehot, axis=0, keepdims=True)
        r_sel = jnp.sum(rv * onehot, axis=0, keepdims=True)
        b_sel = jnp.sum(bv * onehot, axis=0, keepdims=True)
        w_sel = r_sel - l_sel
        h_sel = b_sel - t_sel
        apply_b = any_valid & (min_iou < 1.0)                           # (1, 1)

        # ---- pass B: keep mask + shifted/clamped boxes, per-row stores ------
        for c in range(n_chunks):
            sl = slice(c * CH, (c + 1) * CH)
            blk = boxes_ref[:, sl]
            x1 = blk[0:1]; y1 = blk[1:2]; x2 = blk[2:3]; y2 = blk[3:4]
            bm_f = blk[4:5]
            cx = 0.5 * (x1 + x2)
            cy = 0.5 * (y1 + y2)
            keep = ((l_sel < cx) & (cx < r_sel) & (t_sel < cy) & (cy < b_sel)
                    & (bm_f > 0.5)).astype(jnp.float32)
            ax1 = jnp.clip(x1 - l_sel, 0.0, w_sel)
            ay1 = jnp.clip(y1 - t_sel, 0.0, h_sel)
            ax2 = jnp.clip(x2 - l_sel, 0.0, w_sel)
            ay2 = jnp.clip(y2 - t_sel, 0.0, h_sel)
            meta_ref[0:1, sl] = jnp.where(apply_b, ax1, x1)
            meta_ref[1:2, sl] = jnp.where(apply_b, ay1, y1)
            meta_ref[2:3, sl] = jnp.where(apply_b, ax2, x2)
            meta_ref[3:4, sl] = jnp.where(apply_b, ay2, y2)
            meta_ref[4:5, sl] = jnp.where(apply_b, keep, bm_f)

        # ---- rows 5-7: apply flag, crop params (with [0,0,W,H] fallback) ----
        ones_row = jnp.ones((1, Np), jnp.float32)
        zeros_row = jnp.zeros((1, Np), jnp.float32)
        meta_ref[5:6, :] = jnp.where(apply_b, ones_row, zeros_row)
        l_o = jnp.where(apply_b, l_sel, 0.0)
        t_o = jnp.where(apply_b, t_sel, 0.0)
        r_o = jnp.where(apply_b, r_sel, jnp.float32(width))
        b_o = jnp.where(apply_b, b_sel, jnp.float32(height))
        lane = jax.lax.broadcasted_iota(jnp.int32, (1, Np), 1)
        crop_row = (jnp.where(lane == 0, l_o, 0.0)
                    + jnp.where(lane == 1, t_o, 0.0)
                    + jnp.where(lane == 2, r_o, 0.0)
                    + jnp.where(lane == 3, b_o, 0.0))
        meta_ref[6:7, :] = crop_row
        meta_ref[7:8, :] = zeros_row

    def _run_iou_trials(self, boxes8, crops, min_iou_arr, width, height):
        Np = boxes8.shape[1]
        kernel = functools.partial(self._iou_select_kernel,
                                   width=float(width), height=float(height))
        vmem = pl.BlockSpec(memory_space=pltpu.MemorySpace.VMEM)
        smem = pl.BlockSpec(memory_space=pltpu.MemorySpace.SMEM)
        return pl.pallas_call(
            kernel,
            out_shape=jax.ShapeDtypeStruct((8, Np), jnp.float32),
            in_specs=[vmem, vmem, smem],
            out_specs=vmem,
        )(boxes8, crops, min_iou_arr)

    # ------------------------------------------------------------------ #
    # Pallas kernel 2: apply crop to image (zero outside crop region)     #
    # ------------------------------------------------------------------ #
    @staticmethod
    def _crop_image_kernel(rowm_ref, colm_ref, img_ref, out_ref):
        # rowm_ref: (th, 1) f32 row-inside mask, colm_ref: (1, W) f32 col mask
        inside = (rowm_ref[...] > 0.5) & (colm_ref[...] > 0.5)   # (th, W)
        img = img_ref[...]
        out_ref[...] = jnp.where(inside, img, jnp.zeros_like(img))

    @staticmethod
    def _row_tile(total_rows, width, itemsize, budget_bytes=6 << 20):
        # ~6 MiB per tile: double-buffered in+out ≈ 24 MiB, fits the explicit
        # 48 MiB vmem limit on v5e/v6e (128 MiB VMEM) and v7x (64 MiB VMEM).
        rows = max(8, budget_bytes // max(1, width * itemsize))
        rows = max(8, (rows // 8) * 8)
        if rows >= total_rows:
            if total_rows > 8:
                # keep >= 2 grid steps so both v7x TensorCores get work
                half = (total_rows + 1) // 2
                rows = min(total_rows, max(8, ((half + 7) // 8) * 8))
            else:
                rows = total_rows
        return rows

    def _run_crop_image(self, rowm, colm, image2d):
        R, W = image2d.shape
        itemsize = jnp.dtype(image2d.dtype).itemsize
        th = self._row_tile(R, W, itemsize)
        grid = (pl.cdiv(R, th),)
        return pl.pallas_call(
            self._crop_image_kernel,
            out_shape=jax.ShapeDtypeStruct((R, W), image2d.dtype),
            grid=grid,
            in_specs=[pl.BlockSpec((th, 1), lambda i: (i, 0)),
                      pl.BlockSpec((1, W), lambda i: (0, 0)),
                      pl.BlockSpec((th, W), lambda i: (i, 0))],
            out_specs=pl.BlockSpec((th, W), lambda i: (i, 0)),
            compiler_params=pltpu.CompilerParams(
                dimension_semantics=("parallel",),
                vmem_limit_bytes=48 << 20),
            cost_estimate=pl.CostEstimate(
                flops=R * W,
                transcendentals=0,
                bytes_accessed=2 * R * W * itemsize),
        )(rowm, colm, image2d)

    # ------------------------------------------------------------------ #
    # Forward                                                             #
    # ------------------------------------------------------------------ #
    def __call__(self, key, image, target=None):
        if target is None:
            raise ValueError("RandomIoUCrop requires a target dict")
        boxes = jnp.asarray(target["boxes"], jnp.float32)    # (N, 4) xyxy
        labels = jnp.asarray(target["labels"])
        C, H, W = image.shape
        N = boxes.shape[0]
        T = self.trials
        Np = max(128, ((N + 127) // 128) * 128)               # lane-dense pad

        k_opt, k_scale, k_pos = jax.random.split(key, 3)
        options = jnp.array(self.options, jnp.float32)
        opt_idx = jax.random.randint(k_opt, (), 0, len(self.options))
        min_iou = options[opt_idx]

        # Candidate crops for all trials (matches torchvision sampling math).
        r_scale = self.min_scale + (self.max_scale - self.min_scale) * \
            jax.random.uniform(k_scale, (T, 2), jnp.float32)
        new_w = jnp.floor(W * r_scale[:, 0])
        new_h = jnp.floor(H * r_scale[:, 1])
        r_pos = jax.random.uniform(k_pos, (T, 2), jnp.float32)
        left = jnp.floor((W - new_w) * r_pos[:, 0])
        top = jnp.floor((H - new_h) * r_pos[:, 1])
        crops = jnp.stack([left, top, left + new_w, top + new_h],
                          axis=0).reshape(4, T, 1).astype(jnp.float32)

        # packed boxes: rows 0-3 = xyxy (transposed), row 4 = lane validity mask
        boxes8 = jnp.zeros((8, Np), jnp.float32)
        boxes8 = boxes8.at[0:4, :N].set(boxes.T)
        boxes8 = boxes8.at[4, :N].set(1.0)
        min_iou_arr = jnp.reshape(min_iou, (1,)).astype(jnp.float32)

        meta = self._run_iou_trials(boxes8, crops, min_iou_arr, W, H)

        out_boxes = meta[0:4, :N].T                           # (N, 4)
        keep = meta[4, :N] > 0.5
        applied = meta[5, 0] > 0.5
        crop_i = meta[6, :4].astype(jnp.int32)                # [l,t,r,b], fallback done

        # Image pass: zero pixels outside the selected crop.  Channel axis is
        # collapsed into the row axis and the identity case is skipped entirely
        # (no HBM traffic) via lax.cond.
        image2d = image.reshape(C * H, W)
        row_ids = jnp.arange(H, dtype=jnp.int32)
        col_ids = jnp.arange(W, dtype=jnp.int32)
        row_ok = ((row_ids >= crop_i[1]) & (row_ids < crop_i[3])).astype(jnp.float32)
        rowm = jnp.tile(row_ok, C).reshape(C * H, 1)
        colm = ((col_ids >= crop_i[0]) & (col_ids < crop_i[2])
                ).astype(jnp.float32).reshape(1, W)

        out2d = jax.lax.cond(
            applied,
            lambda img: self._run_crop_image(rowm, colm, img),
            lambda img: img,
            image2d)
        out_image = out2d.reshape(C, H, W)

        out_target = {
            "boxes": out_boxes,
            "labels": labels,
            "keep": keep,          # which boxes survive the crop
            "crop": crop_i,        # selected crop [l, t, r, b]
            "applied": applied,
        }
        return out_image, out_target


if __name__ == "__main__":
    key = jax.random.PRNGKey(0)
    k_img, k_xy, k_wh, k_fwd = jax.random.split(key, 4)

    C, H, W, N = 4, 16, 16, 8
    image = jax.random.uniform(k_img, (C, H, W), jnp.float32)

    xy = jax.random.uniform(k_xy, (N, 2), jnp.float32) * 8.0
    wh = 1.0 + jax.random.uniform(k_wh, (N, 2), jnp.float32) * 6.0
    boxes = jnp.concatenate([xy, jnp.minimum(xy + wh, 16.0)], axis=1)
    labels = jnp.arange(N, dtype=jnp.int32)
    target = {"boxes": boxes, "labels": labels}

    module = RandomIoUCrop()
    out_image, out_target = module(k_fwd, image, target)
    jax.block_until_ready(out_image)
    jax.block_until_ready(out_target["boxes"])
    print("KERNEL_OK")
</pallas_src>

<mosaic_0001>
module attributes {stable_mosaic.version = 11 : i64} {
  func.func @_iou_select_kernel(%arg0: memref<8x128xf32, #tpu.memory_space<vmem>>, %arg1: memref<4x40x1xf32, #tpu.memory_space<vmem>>, %arg2: memref<1xf32, #tpu.memory_space<smem>>, %arg3: memref<8x128xf32, #tpu.memory_space<vmem>>) attributes {dimension_semantics = [], scalar_prefetch = 0 : i64, scratch_operands = 0 : i64, tpu.core_type = #tpu.core_type<tc>} {
    %c0 = arith.constant 0 : index
    %0 = memref.load %arg2[%c0] : memref<1xf32, #tpu.memory_space<smem>>
    %c0_0 = arith.constant 0 : index
    %c0_1 = arith.constant 0 : index
    %c0_2 = arith.constant 0 : index
    %1 = vector.load %arg1[%c0_0, %c0_1, %c0_2] : memref<4x40x1xf32, #tpu.memory_space<vmem>>, vector<4x40x1xf32>
    %2 = vector.extract_strided_slice %1 {offsets = [0, 0, 0], sizes = [1, 40, 1], strides = [1, 1, 1]} : vector<4x40x1xf32> to vector<1x40x1xf32>
    %3 = vector.shape_cast %2 : vector<1x40x1xf32> to vector<40x1xf32>
    %4 = vector.extract_strided_slice %1 {offsets = [1, 0, 0], sizes = [1, 40, 1], strides = [1, 1, 1]} : vector<4x40x1xf32> to vector<1x40x1xf32>
    %5 = vector.shape_cast %4 : vector<1x40x1xf32> to vector<40x1xf32>
    %6 = vector.extract_strided_slice %1 {offsets = [2, 0, 0], sizes = [1, 40, 1], strides = [1, 1, 1]} : vector<4x40x1xf32> to vector<1x40x1xf32>
    %7 = vector.shape_cast %6 : vector<1x40x1xf32> to vector<40x1xf32>
    %8 = vector.extract_strided_slice %1 {offsets = [3, 0, 0], sizes = [1, 40, 1], strides = [1, 1, 1]} : vector<4x40x1xf32> to vector<1x40x1xf32>
    %9 = vector.shape_cast %8 : vector<1x40x1xf32> to vector<40x1xf32>
    %10 = arith.subf %7, %3 : vector<40x1xf32>
    %11 = arith.subf %9, %5 : vector<40x1xf32>
    %12 = arith.mulf %10, %11 : vector<40x1xf32>
    %cst = arith.constant 5.000000e-01 : f32
    %13 = vector.broadcast %cst : f32 to vector<40x1xf32>
    %14 = arith.mulf %13, %11 : vector<40x1xf32>
    %15 = arith.cmpf oge, %10, %14 : vector<40x1xf32>
    %cst_3 = arith.constant 2.000000e+00 : f32
    %16 = vector.broadcast %cst_3 : f32 to vector<40x1xf32>
    %17 = arith.mulf %16, %11 : vector<40x1xf32>
    %18 = arith.cmpf ole, %10, %17 : vector<40x1xf32>
    %19 = arith.andi %15, %18 : vector<40x1xi1>
    %cst_4 = arith.constant 1.000000e+00 : f32
    %20 = vector.broadcast %cst_4 : f32 to vector<40x1xf32>
    %21 = arith.cmpf oge, %10, %20 : vector<40x1xf32>
    %22 = arith.andi %19, %21 : vector<40x1xi1>
    %cst_5 = arith.constant 1.000000e+00 : f32
    %23 = vector.broadcast %cst_5 : f32 to vector<40x1xf32>
    %24 = arith.cmpf oge, %11, %23 : vector<40x1xf32>
    %25 = arith.andi %22, %24 : vector<40x1xi1>
    %cst_6 = arith.constant 0.000000e+00 : f32
    %26 = vector.broadcast %cst_6 : f32 to vector<40x1xf32>
    %cst_7 = arith.constant 0.000000e+00 : f32
    %27 = vector.broadcast %cst_7 : f32 to vector<40x1xf32>
    %c0_8 = arith.constant 0 : index
    %c0_9 = arith.constant 0 : index
    %28 = vector.load %arg0[%c0_8, %c0_9] : memref<8x128xf32, #tpu.memory_space<vmem>>, vector<8x128xf32>
    %29 = vector.extract_strided_slice %28 {offsets = [0, 0], sizes = [1, 128], strides = [1, 1]} : vector<8x128xf32> to vector<1x128xf32>
    %30 = vector.extract_strided_slice %28 {offsets = [1, 0], sizes = [1, 128], strides = [1, 1]} : vector<8x128xf32> to vector<1x128xf32>
    %31 = vector.extract_strided_slice %28 {offsets = [2, 0], sizes = [1, 128], strides = [1, 1]} : vector<8x128xf32> to vector<1x128xf32>
    %32 = vector.extract_strided_slice %28 {offsets = [3, 0], sizes = [1, 128], strides = [1, 1]} : vector<8x128xf32> to vector<1x128xf32>
    %33 = vector.extract_strided_slice %28 {offsets = [4, 0], sizes = [1, 128], strides = [1, 1]} : vector<8x128xf32> to vector<1x128xf32>
    %cst_10 = arith.constant 5.000000e-01 : f32
    %34 = vector.broadcast %cst_10 : f32 to vector<1x128xf32>
    %35 = arith.cmpf ogt, %33, %34 : vector<1x128xf32>
    %36 = arith.addf %29, %31 : vector<1x128xf32>
    %cst_11 = arith.constant 5.000000e-01 : f32
    %37 = vector.broadcast %cst_11 : f32 to vector<1x128xf32>
    %38 = arith.mulf %37, %36 : vector<1x128xf32>
    %39 = arith.addf %30, %32 : vector<1x128xf32>
    %cst_12 = arith.constant 5.000000e-01 : f32
    %40 = vector.broadcast %cst_12 : f32 to vector<1x128xf32>
    %41 = arith.mulf %40, %39 : vector<1x128xf32>
    %42 = vector.broadcast %3 : vector<40x1xf32> to vector<40x128xf32>
    %43 = vector.broadcast %38 : vector<1x128xf32> to vector<40x128xf32>
    %44 = arith.cmpf olt, %42, %43 : vector<40x128xf32>
    %45 = vector.broadcast %38 : vector<1x128xf32> to vector<40x128xf32>
    %46 = vector.broadcast %7 : vector<40x1xf32> to vector<40x128xf32>
    %47 = arith.cmpf olt, %45, %46 : vector<40x128xf32>
    %48 = arith.andi %44, %47 : vector<40x128xi1>
    %49 = vector.broadcast %5 : vector<40x1xf32> to vector<40x128xf32>
    %50 = vector.broadcast %41 : vector<1x128xf32> to vector<40x128xf32>
    %51 = arith.cmpf olt, %49, %50 : vector<40x128xf32>
    %52 = arith.andi %48, %51 : vector<40x128xi1>
    %53 = vector.broadcast %41 : vector<1x128xf32> to vector<40x128xf32>
    %54 = vector.broadcast %9 : vector<40x1xf32> to vector<40x128xf32>
    %55 = arith.cmpf olt, %53, %54 : vector<40x128xf32>
    %56 = arith.andi %52, %55 : vector<40x128xi1>
    %57 = vector.broadcast %35 : vector<1x128xi1> to vector<40x128xi1>
    %58 = arith.andi %56, %57 : vector<40x128xi1>
    %59 = vector.broadcast %31 : vector<1x128xf32> to vector<40x128xf32>
    %60 = vector.broadcast %7 : vector<40x1xf32> to vector<40x128xf32>
    %61 = arith.minimumf %59, %60 : vector<40x128xf32>
    %62 = vector.broadcast %29 : vector<1x128xf32> to vector<40x128xf32>
    %63 = vector.broadcast %3 : vector<40x1xf32> to vector<40x128xf32>
    %64 = arith.maximumf %62, %63 : vector<40x128xf32>
    %65 = arith.subf %61, %64 : vector<40x128xf32>
    %cst_13 = arith.constant 0.000000e+00 : f32
    %66 = vector.broadcast %cst_13 : f32 to vector<40x128xf32>
    %67 = arith.maximumf %65, %66 : vector<40x128xf32>
    %68 = vector.broadcast %32 : vector<1x128xf32> to vector<40x128xf32>
    %69 = vector.broadcast %9 : vector<40x1xf32> to vector<40x128xf32>
    %70 = arith.minimumf %68, %69 : vector<40x128xf32>
    %71 = vector.broadcast %30 : vector<1x128xf32> to vector<40x128xf32>
    %72 = vector.broadcast %5 : vector<40x1xf32> to vector<40x128xf32>
    %73 = arith.maximumf %71, %72 : vector<40x128xf32>
    %74 = arith.subf %70, %73 : vector<40x128xf32>
    %cst_14 = arith.constant 0.000000e+00 : f32
    %75 = vector.broadcast %cst_14 : f32 to vector<40x128xf32>
    %76 = arith.maximumf %74, %75 : vector<40x128xf32>
    %77 = arith.mulf %67, %76 : vector<40x128xf32>
    %78 = arith.subf %31, %29 : vector<1x128xf32>
    %79 = arith.subf %32, %30 : vector<1x128xf32>
    %80 = arith.mulf %78, %79 : vector<1x128xf32>
    %81 = vector.broadcast %80 : vector<1x128xf32> to vector<40x128xf32>
    %82 = vector.broadcast %12 : vector<40x1xf32> to vector<40x128xf32>
    %83 = arith.addf %81, %82 : vector<40x128xf32>
    %84 = arith.subf %83, %77 : vector<40x128xf32>
    %85 = vector.broadcast %0 : f32 to vector<40x128xf32>
    %86 = arith.mulf %85, %84 : vector<40x128xf32>
    %87 = arith.cmpf oge, %77, %86 : vector<40x128xf32>
    %88 = arith.andi %58, %87 : vector<40x128xi1>
    %89 = arith.extui %58 : vector<40x128xi1> to vector<40x128xi32>
    %90 = arith.sitofp %89 : vector<40x128xi32> to vector<40x128xf32>
    %cst_15 = arith.constant dense<0xFF800000> : vector<40xf32>
    %91 = vector.multi_reduction <maximumf>, %90, %cst_15 [1] : vector<40x128xf32> to vector<40xf32>
    %92 = vector.shape_cast %91 : vector<40xf32> to vector<40x1xf32>
    %93 = arith.maximumf %26, %92 : vector<40x1xf32>
    %94 = arith.extui %88 : vector<40x128xi1> to vector<40x128xi32>
    %95 = arith.sitofp %94 : vector<40x128xi32> to vector<40x128xf32>
    %cst_16 = arith.constant dense<0xFF800000> : vector<40xf32>
    %96 = vector.multi_reduction <maximumf>, %95, %cst_16 [1] : vector<40x128xf32> to vector<40xf32>
    %97 = vector.shape_cast %96 : vector<40xf32> to vector<40x1xf32>
    %98 = arith.maximumf %27, %97 : vector<40x1xf32>
    %cst_17 = arith.constant 5.000000e-01 : f32
    %99 = vector.broadcast %cst_17 : f32 to vector<40x1xf32>
    %100 = arith.cmpf ogt, %93, %99 : vector<40x1xf32>
    %101 = arith.andi %25, %100 : vector<40x1xi1>
    %cst_18 = arith.constant 5.000000e-01 : f32
    %102 = vector.broadcast %cst_18 : f32 to vector<40x1xf32>
    %103 = arith.cmpf ogt, %98, %102 : vector<40x1xf32>
    %104 = arith.andi %101, %103 : vector<40x1xi1>
    %105 = tpu.iota {dimensions = array<i32: 0>} : vector<40x1xi32>
    %106 = arith.sitofp %105 : vector<40x1xi32> to vector<40x1xf32>
    %cst_19 = arith.constant 4.000000e+01 : f32
    %107 = vector.broadcast %cst_19 : f32 to vector<40x1xf32>
    %108 = arith.select %104, %106, %107 : vector<40x1xi1>, vector<40x1xf32>
    %cst_20 = arith.constant dense<0x7F800000> : vector<1xf32>
    %109 = vector.multi_reduction <minimumf>, %108, %cst_20 [0] : vector<40x1xf32> to vector<1xf32>
    %110 = vector.shape_cast %109 : vector<1xf32> to vector<1x1xf32>
    %cst_21 = arith.constant 4.000000e+01 : f32
    %111 = vector.broadcast %cst_21 : f32 to vector<1x1xf32>
    %112 = arith.cmpf olt, %110, %111 : vector<1x1xf32>
    %113 = vector.broadcast %110 : vector<1x1xf32> to vector<40x1xf32>
    %114 = arith.cmpf oeq, %106, %113 : vector<40x1xf32>
    %115 = arith.andi %114, %104 : vector<40x1xi1>
    %116 = arith.extui %115 : vector<40x1xi1> to vector<40x1xi32>
    %117 = arith.sitofp %116 : vector<40x1xi32> to vector<40x1xf32>
    %118 = arith.mulf %3, %117 : vector<40x1xf32>
    %cst_22 = arith.constant dense<0.000000e+00> : vector<1xf32>
    %119 = vector.multi_reduction <add>, %118, %cst_22 [0] : vector<40x1xf32> to vector<1xf32>
    %120 = vector.shape_cast %119 : vector<1xf32> to vector<1x1xf32>
    %121 = arith.mulf %5, %117 : vector<40x1xf32>
    %cst_23 = arith.constant dense<0.000000e+00> : vector<1xf32>
    %122 = vector.multi_reduction <add>, %121, %cst_23 [0] : vector<40x1xf32> to vector<1xf32>
    %123 = vector.shape_cast %122 : vector<1xf32> to vector<1x1xf32>
    %124 = arith.mulf %7, %117 : vector<40x1xf32>
    %cst_24 = arith.constant dense<0.000000e+00> : vector<1xf32>
    %125 = vector.multi_reduction <add>, %124, %cst_24 [0] : vector<40x1xf32> to vector<1xf32>
    %126 = vector.shape_cast %125 : vector<1xf32> to vector<1x1xf32>
    %127 = arith.mulf %9, %117 : vector<40x1xf32>
    %cst_25 = arith.constant dense<0.000000e+00> : vector<1xf32>
    %128 = vector.multi_reduction <add>, %127, %cst_25 [0] : vector<40x1xf32> to vector<1xf32>
    %129 = vector.shape_cast %128 : vector<1xf32> to vector<1x1xf32>
    %130 = arith.subf %126, %120 : vector<1x1xf32>
    %131 = arith.subf %129, %123 : vector<1x1xf32>
    %cst_26 = arith.constant 1.000000e+00 : f32
    %132 = arith.cmpf olt, %0, %cst_26 : f32
    %133 = vector.broadcast %132 : i1 to vector<1x1xi1>
    %134 = arith.andi %112, %133 : vector<1x1xi1>
    %c0_27 = arith.constant 0 : index
    %c0_28 = arith.constant 0 : index
    %135 = vector.load %arg0[%c0_27, %c0_28] : memref<8x128xf32, #tpu.memory_space<vmem>>, vector<8x128xf32>
    %136 = vector.extract_strided_slice %135 {offsets = [0, 0], sizes = [1, 128], strides = [1, 1]} : vector<8x128xf32> to vector<1x128xf32>
    %137 = vector.extract_strided_slice %135 {offsets = [1, 0], sizes = [1, 128], strides = [1, 1]} : vector<8x128xf32> to vector<1x128xf32>
    %138 = vector.extract_strided_slice %135 {offsets = [2, 0], sizes = [1, 128], strides = [1, 1]} : vector<8x128xf32> to vector<1x128xf32>
    %139 = vector.extract_strided_slice %135 {offsets = [3, 0], sizes = [1, 128], strides = [1, 1]} : vector<8x128xf32> to vector<1x128xf32>
    %140 = vector.extract_strided_slice %135 {offsets = [4, 0], sizes = [1, 128], strides = [1, 1]} : vector<8x128xf32> to vector<1x128xf32>
    %141 = arith.addf %136, %138 : vector<1x128xf32>
    %cst_29 = arith.constant 5.000000e-01 : f32
    %142 = vector.broadcast %cst_29 : f32 to vector<1x128xf32>
    %143 = arith.mulf %142, %141 : vector<1x128xf32>
    %144 = arith.addf %137, %139 : vector<1x128xf32>
    %cst_30 = arith.constant 5.000000e-01 : f32
    %145 = vector.broadcast %cst_30 : f32 to vector<1x128xf32>
    %146 = arith.mulf %145, %144 : vector<1x128xf32>
    %147 = vector.broadcast %120 : vector<1x1xf32> to vector<1x128xf32>
    %148 = arith.cmpf olt, %147, %143 : vector<1x128xf32>
    %149 = vector.broadcast %126 : vector<1x1xf32> to vector<1x128xf32>
    %150 = arith.cmpf olt, %143, %149 : vector<1x128xf32>
    %151 = arith.andi %148, %150 : vector<1x128xi1>
    %152 = vector.broadcast %123 : vector<1x1xf32> to vector<1x128xf32>
    %153 = arith.cmpf olt, %152, %146 : vector<1x128xf32>
    %154 = arith.andi %151, %153 : vector<1x128xi1>
    %155 = vector.broadcast %129 : vector<1x1xf32> to vector<1x128xf32>
    %156 = arith.cmpf olt, %146, %155 : vector<1x128xf32>
    %157 = arith.andi %154, %156 : vector<1x128xi1>
    %cst_31 = arith.constant 5.000000e-01 : f32
    %158 = vector.broadcast %cst_31 : f32 to vector<1x128xf32>
    %159 = arith.cmpf ogt, %140, %158 : vector<1x128xf32>
    %160 = arith.andi %157, %159 : vector<1x128xi1>
    %161 = arith.extui %160 : vector<1x128xi1> to vector<1x128xi32>
    %162 = arith.sitofp %161 : vector<1x128xi32> to vector<1x128xf32>
    %163 = vector.broadcast %120 : vector<1x1xf32> to vector<1x128xf32>
    %164 = arith.subf %136, %163 : vector<1x128xf32>
    %cst_32 = arith.constant 0.000000e+00 : f32
    %165 = vector.broadcast %cst_32 : f32 to vector<1x128xf32>
    %166 = arith.maximumf %165, %164 : vector<1x128xf32>
    %167 = vector.broadcast %130 : vector<1x1xf32> to vector<1x128xf32>
    %168 = arith.minimumf %167, %166 : vector<1x128xf32>
    %169 = vector.broadcast %123 : vector<1x1xf32> to vector<1x128xf32>
    %170 = arith.subf %137, %169 : vector<1x128xf32>
    %cst_33 = arith.constant 0.000000e+00 : f32
    %171 = vector.broadcast %cst_33 : f32 to vector<1x128xf32>
    %172 = arith.maximumf %171, %170 : vector<1x128xf32>
    %173 = vector.broadcast %131 : vector<1x1xf32> to vector<1x128xf32>
    %174 = arith.minimumf %173, %172 : vector<1x128xf32>
    %175 = vector.broadcast %120 : vector<1x1xf32> to vector<1x128xf32>
    %176 = arith.subf %138, %175 : vector<1x128xf32>
    %cst_34 = arith.constant 0.000000e+00 : f32
    %177 = vector.broadcast %cst_34 : f32 to vector<1x128xf32>
    %178 = arith.maximumf %177, %176 : vector<1x128xf32>
    %179 = vector.broadcast %130 : vector<1x1xf32> to vector<1x128xf32>
    %180 = arith.minimumf %179, %178 : vector<1x128xf32>
    %181 = vector.broadcast %123 : vector<1x1xf32> to vector<1x128xf32>
    %182 = arith.subf %139, %181 : vector<1x128xf32>
    %cst_35 = arith.constant 0.000000e+00 : f32
    %183 = vector.broadcast %cst_35 : f32 to vector<1x128xf32>
    %184 = arith.maximumf %183, %182 : vector<1x128xf32>
    %185 = vector.broadcast %131 : vector<1x1xf32> to vector<1x128xf32>
    %186 = arith.minimumf %185, %184 : vector<1x128xf32>
    %187 = vector.shape_cast %134 : vector<1x1xi1> to vector<1x1xi1>
    %188 = vector.broadcast %187 : vector<1x1xi1> to vector<1x128xi1>
    %189 = arith.select %188, %168, %136 : vector<1x128xi1>, vector<1x128xf32>
    %c0_36 = arith.constant 0 : index
    %c0_37 = arith.constant 0 : index
    %190 = vector.load %arg3[%c0_36, %c0_37] : memref<8x128xf32, #tpu.memory_space<vmem>>, vector<1x128xf32>
    tpu.vector_store %arg3[%c0_36, %c0_37], %189 {strides = array<i32>} : memref<8x128xf32, #tpu.memory_space<vmem>>, vector<1x128xf32>,
    %191 = vector.shape_cast %134 : vector<1x1xi1> to vector<1x1xi1>
    %192 = vector.broadcast %191 : vector<1x1xi1> to vector<1x128xi1>
    %193 = arith.select %192, %174, %137 : vector<1x128xi1>, vector<1x128xf32>
    %c1 = arith.constant 1 : index
    %c0_38 = arith.constant 0 : index
    %194 = vector.load %arg3[%c1, %c0_38] : memref<8x128xf32, #tpu.memory_space<vmem>>, vector<1x128xf32>
    tpu.vector_store %arg3[%c1, %c0_38], %193 {strides = array<i32>} : memref<8x128xf32, #tpu.memory_space<vmem>>, vector<1x128xf32>,
    %195 = vector.shape_cast %134 : vector<1x1xi1> to vector<1x1xi1>
    %196 = vector.broadcast %195 : vector<1x1xi1> to vector<1x128xi1>
    %197 = arith.select %196, %180, %138 : vector<1x128xi1>, vector<1x128xf32>
    %c2 = arith.constant 2 : index
    %c0_39 = arith.constant 0 : index
    %198 = vector.load %arg3[%c2, %c0_39] : memref<8x128xf32, #tpu.memory_space<vmem>>, vector<1x128xf32>
    tpu.vector_store %arg3[%c2, %c0_39], %197 {strides = array<i32>} : memref<8x128xf32, #tpu.memory_space<vmem>>, vector<1x128xf32>,
    %199 = vector.shape_cast %134 : vector<1x1xi1> to vector<1x1xi1>
    %200 = vector.broadcast %199 : vector<1x1xi1> to vector<1x128xi1>
    %201 = arith.select %200, %186, %139 : vector<1x128xi1>, vector<1x128xf32>
    %c3 = arith.constant 3 : index
    %c0_40 = arith.constant 0 : index
    %202 = vector.load %arg3[%c3, %c0_40] : memref<8x128xf32, #tpu.memory_space<vmem>>, vector<1x128xf32>
    tpu.vector_store %arg3[%c3, %c0_40], %201 {strides = array<i32>} : memref<8x128xf32, #tpu.memory_space<vmem>>, vector<1x128xf32>,
    %203 = vector.shape_cast %134 : vector<1x1xi1> to vector<1x1xi1>
    %204 = vector.broadcast %203 : vector<1x1xi1> to vector<1x128xi1>
    %205 = arith.select %204, %162, %140 : vector<1x128xi1>, vector<1x128xf32>
    %c4 = arith.constant 4 : index
    %c0_41 = arith.constant 0 : index
    %206 = vector.load %arg3[%c4, %c0_41] : memref<8x128xf32, #tpu.memory_space<vmem>>, vector<1x128xf32>
    tpu.vector_store %arg3[%c4, %c0_41], %205 {strides = array<i32>} : memref<8x128xf32, #tpu.memory_space<vmem>>, vector<1x128xf32>,
    %cst_42 = arith.constant 1.000000e+00 : f32
    %207 = vector.broadcast %cst_42 : f32 to vector<1x128xf32>
    %cst_43 = arith.constant 0.000000e+00 : f32
    %208 = vector.broadcast %cst_43 : f32 to vector<1x128xf32>
    %209 = vector.shape_cast %134 : vector<1x1xi1> to vector<1x1xi1>
    %210 = vector.broadcast %209 : vector<1x1xi1> to vector<1x128xi1>
    %211 = arith.select %210, %207, %208 : vector<1x128xi1>, vector<1x128xf32>
    %c5 = arith.constant 5 : index
    %c0_44 = arith.constant 0 : index
    %212 = vector.load %arg3[%c5, %c0_44] : memref<8x128xf32, #tpu.memory_space<vmem>>, vector<1x128xf32>
    tpu.vector_store %arg3[%c5, %c0_44], %211 {strides = array<i32>} : memref<8x128xf32, #tpu.memory_space<vmem>>, vector<1x128xf32>,
    %cst_45 = arith.constant 0.000000e+00 : f32
    %213 = vector.broadcast %cst_45 : f32 to vector<1x1xf32>
    %214 = arith.select %134, %120, %213 : vector<1x1xi1>, vector<1x1xf32>
    %cst_46 = arith.constant 0.000000e+00 : f32
    %215 = vector.broadcast %cst_46 : f32 to vector<1x1xf32>
    %216 = arith.select %134, %123, %215 : vector<1x1xi1>, vector<1x1xf32>
    %cst_47 = arith.constant 1.600000e+01 : f32
    %217 = vector.broadcast %cst_47 : f32 to vector<1x1xf32>
    %218 = arith.select %134, %126, %217 : vector<1x1xi1>, vector<1x1xf32>
    %cst_48 = arith.constant 1.600000e+01 : f32
    %219 = vector.broadcast %cst_48 : f32 to vector<1x1xf32>
    %220 = arith.select %134, %129, %219 : vector<1x1xi1>, vector<1x1xf32>
    %221 = tpu.iota {dimensions = array<i32: 1>} : vector<1x128xi32>
    %c0_i32 = arith.constant 0 : i32
    %222 = vector.broadcast %c0_i32 : i32 to vector<1x128xi32>
    %223 = arith.cmpi eq, %221, %222 : vector<1x128xi32>
    %cst_49 = arith.constant 0.000000e+00 : f32
    %224 = vector.shape_cast %214 : vector<1x1xf32> to vector<1x1xf32>
    %225 = vector.broadcast %224 : vector<1x1xf32> to vector<1x128xf32>
    %226 = vector.broadcast %cst_49 : f32 to vector<1x128xf32>
    %227 = arith.select %223, %225, %226 : vector<1x128xi1>, vector<1x128xf32>
    %c1_i32 = arith.constant 1 : i32
    %228 = vector.broadcast %c1_i32 : i32 to vector<1x128xi32>
    %229 = arith.cmpi eq, %221, %228 : vector<1x128xi32>
    %cst_50 = arith.constant 0.000000e+00 : f32
    %230 = vector.shape_cast %216 : vector<1x1xf32> to vector<1x1xf32>
    %231 = vector.broadcast %230 : vector<1x1xf32> to vector<1x128xf32>
    %232 = vector.broadcast %cst_50 : f32 to vector<1x128xf32>
    %233 = arith.select %229, %231, %232 : vector<1x128xi1>, vector<1x128xf32>
    %234 = arith.addf %227, %233 : vector<1x128xf32>
    %c2_i32 = arith.constant 2 : i32
    %235 = vector.broadcast %c2_i32 : i32 to vector<1x128xi32>
    %236 = arith.cmpi eq, %221, %235 : vector<1x128xi32>
    %cst_51 = arith.constant 0.000000e+00 : f32
    %237 = vector.shape_cast %218 : vector<1x1xf32> to vector<1x1xf32>
    %238 = vector.broadcast %237 : vector<1x1xf32> to vector<1x128xf32>
    %239 = vector.broadcast %cst_51 : f32 to vector<1x128xf32>
    %240 = arith.select %236, %238, %239 : vector<1x128xi1>, vector<1x128xf32>
    %241 = arith.addf %234, %240 : vector<1x128xf32>
    %c3_i32 = arith.constant 3 : i32
    %242 = vector.broadcast %c3_i32 : i32 to vector<1x128xi32>
    %243 = arith.cmpi eq, %221, %242 : vector<1x128xi32>
    %cst_52 = arith.constant 0.000000e+00 : f32
    %244 = vector.shape_cast %220 : vector<1x1xf32> to vector<1x1xf32>
    %245 = vector.broadcast %244 : vector<1x1xf32> to vector<1x128xf32>
    %246 = vector.broadcast %cst_52 : f32 to vector<1x128xf32>
    %247 = arith.select %243, %245, %246 : vector<1x128xi1>, vector<1x128xf32>
    %248 = arith.addf %241, %247 : vector<1x128xf32>
    %c6 = arith.constant 6 : index
    %c0_53 = arith.constant 0 : index
    %249 = vector.load %arg3[%c6, %c0_53] : memref<8x128xf32, #tpu.memory_space<vmem>>, vector<1x128xf32>
    tpu.vector_store %arg3[%c6, %c0_53], %248 {strides = array<i32>} : memref<8x128xf32, #tpu.memory_space<vmem>>, vector<1x128xf32>,
    %c7 = arith.constant 7 : index
    %c0_54 = arith.constant 0 : index
    %250 = vector.load %arg3[%c7, %c0_54] : memref<8x128xf32, #tpu.memory_space<vmem>>, vector<1x128xf32>
    tpu.vector_store %arg3[%c7, %c0_54], %208 {strides = array<i32>} : memref<8x128xf32, #tpu.memory_space<vmem>>, vector<1x128xf32>,
    return
  }
}

</mosaic_0001>

<llo_original>
// kernel: tpu_custom_call.1
$region0: #{tpu_custom_call.1}
  #allocation0 [shape = 'u32[]', space=smem, size = 0x4, offset = 0x4, fixed_abs, tag = 'smem constant byte address 0x4 - core index']
  #allocation1 [shape = 'u32[144,128]{1,0:T(1,128)}', space=vmem, size = 0x12000, scoped, tag = 'internal scratch']
  #allocation2 [shape = 'f32[1]{0:T(128)S(6)}', space=smem, size = 0x200, scoped, tag = 'scoped memory for tpu_custom_call.1']
  %s0 = inlined_call_operand.vmem [shape: f32[8,128], index: 0, kind: input, shape index: {}]
  %s1 = inlined_call_operand.vmem [shape: f32[4,40,1], index: 1, kind: input, shape index: {}]
  %s2 = inlined_call_operand.<no memory space> [shape: f32[1], index: 2, kind: input, shape index: {}]
  %s3 = inlined_call_operand.hbm [shape: f32[8,128], index: 3, kind: output, shape index: {}]
  %s4 = sld [smem:[#allocation0]]
  $region22: #{tpu_custom_call.1} parent=0
    _
  %s6 = ssub.s32 1, %s4
  %s7 = scalar_select 0, %s6, %s4
  %8 = sst [smem:[#allocation2]] %s2
  $region1: #{tpu_custom_call.1} parent=0
    #allocation3 [shape = 'u8[4096]{0}', space=vmem, size = 0x1000, scoped, tag = 'output window, operand 0, single buffered']
    #allocation4 [shape = 's32[1]{0}', space=sflag, size = 0x4, scoped, tag = 'scoped memory for tpu_custom_call.1']
    %9 = vsyncpa [#allocation4], 0
    // Predicated region
    $region2: #{tpu_custom_call.1} parent=1 // pred_check
      _
    $region3: #{tpu_custom_call.1} parent=1 // pred_check_branch
      %11 = sbr.rel (0) target = $region5
    $region4: #{tpu_custom_call.1} parent=1 // pred_region
      _
    $region5: #{tpu_custom_call.1} parent=1 // pred_fallthru
      _
    // Predicated region
    $region6: #{tpu_custom_call.1} parent=1 // pred_check
      _
    $region7: #{tpu_custom_call.1} parent=1 // pred_check_branch
      %13 = sbr.rel (0) target = $region9
    $region8: #{tpu_custom_call.1} parent=1 // pred_region
      _
    $region9: #{tpu_custom_call.1} parent=1 // pred_fallthru
      _
    // Predicated region
    $region10: #{tpu_custom_call.1} parent=1 // pred_check
      _
    $region11: #{tpu_custom_call.1} parent=1 // pred_check_branch
      %15 = sbr.rel (0) target = $region13
    $region12: #{tpu_custom_call.1} parent=1 // pred_region
      _
    $region13: #{tpu_custom_call.1} parent=1 // pred_fallthru
      _
    %s16 = sld [smem:[#allocation2]]
    %v17 = vld [vmem:[%s1] sm:$0xff]
    %v18 = vld [vmem:[%s1 + $0x8] sm:$0xff]
    %v19 = vld [vmem:[%s1 + $0x10] sm:$0xff]
    %v20 = vld [vmem:[%s1 + $0x18] sm:$0xff]
    %v21 = vld [vmem:[%s1 + $0x20] sm:$0xff]
    %v22 = vld [vmem:[%s1 + $0x28] sm:$0xff]
    %v23 = vld [vmem:[%s1 + $0x30] sm:$0xff]
    %v24 = vld [vmem:[%s1 + $0x38] sm:$0xff]
    %v25 = vld [vmem:[%s1 + $0x40] sm:$0xff]
    %v26 = vld [vmem:[%s1 + $0x48] sm:$0xff]
    %v27 = vld [vmem:[%s1 + $0x50] sm:$0xff]
    %v28 = vld [vmem:[%s1 + $0x58] sm:$0xff]
    %v29 = vld [vmem:[%s1 + $0x60] sm:$0xff]
    %v30 = vld [vmem:[%s1 + $0x68] sm:$0xff]
    %v31 = vld [vmem:[%s1 + $0x70] sm:$0xff]
    %v32 = vld [vmem:[%s1 + $0x78] sm:$0xff]
    %v33 = vld [vmem:[%s1 + $0x80] sm:$0xff]
    %v34 = vld [vmem:[%s1 + $0x88] sm:$0xff]
    %v35 = vld [vmem:[%s1 + $0x90] sm:$0xff]
    %v36 = vld [vmem:[%s1 + $0x98] sm:$0xff]
    %v37 = vsub.f32 %v27, %v17
    %v38 = vsub.f32 %v28, %v18
    %v39 = vsub.f32 %v29, %v19
    %v40 = vsub.f32 %v30, %v20
    %v41 = vsub.f32 %v31, %v21
    %v42 = vsub.f32 %v32, %v22
    %v43 = vsub.f32 %v33, %v23
    %v44 = vsub.f32 %v34, %v24
    %v45 = vsub.f32 %v35, %v25
    %v46 = vsub.f32 %v36, %v26
    %v47 = vmul.f32 %v37, %v42
    %v48 = vmul.f32 %v38, %v43
    %v49 = vmul.f32 %v39, %v44
    %v50 = vmul.f32 %v40, %v45
    %v51 = vmul.f32 %v41, %v46
    %v52 = vmul.f32 %v42, 0.5
    %v53 = vmul.f32 %v43, 0.5
    %v54 = vmul.f32 %v44, 0.5
    %v55 = vmul.f32 %v45, 0.5
    %v56 = vmul.f32 %v46, 0.5
    %vm57 = vcmp.ge.f32.partialorder %v37, %v52
    %vm58 = vcmp.ge.f32.partialorder %v38, %v53
    %vm59 = vcmp.ge.f32.partialorder %v39, %v54
    %vm60 = vcmp.ge.f32.partialorder %v40, %v55
    %vm61 = vcmp.ge.f32.partialorder %v41, %v56
    %v62 = vmul.f32 %v42, 2.0
    %v63 = vmul.f32 %v43, 2.0
    %v64 = vmul.f32 %v44, 2.0
    %v65 = vmul.f32 %v45, 2.0
    %v66 = vmul.f32 %v46, 2.0
    %vm67 = vcmp.le.f32.partialorder %v37, %v62
    %vm68 = vcmp.le.f32.partialorder %v38, %v63
    %vm69 = vcmp.le.f32.partialorder %v39, %v64
    %vm70 = vcmp.le.f32.partialorder %v40, %v65
    %vm71 = vcmp.le.f32.partialorder %v41, %v66
    %vm72 = vmand %vm57, %vm67
    %vm73 = vmand %vm58, %vm68
    %vm74 = vmand %vm59, %vm69
    %vm75 = vmand %vm60, %vm70
    %vm76 = vmand %vm61, %vm71
    %vm77 = vcmp.ge.f32.partialorder %v37, 1.0
    %vm78 = vcmp.ge.f32.partialorder %v38, 1.0
    %vm79 = vcmp.ge.f32.partialorder %v39, 1.0
    %vm80 = vcmp.ge.f32.partialorder %v40, 1.0
    %vm81 = vcmp.ge.f32.partialorder %v41, 1.0
    %vm82 = vmand %vm72, %vm77
    %vm83 = vmand %vm73, %vm78
    %vm84 = vmand %vm74, %vm79
    %vm85 = vmand %vm75, %vm80
    %vm86 = vmand %vm76, %vm81
    %vm87 = vcmp.ge.f32.partialorder %v42, 1.0
    %vm88 = vcmp.ge.f32.partialorder %v43, 1.0
    %vm89 = vcmp.ge.f32.partialorder %v44, 1.0
    %vm90 = vcmp.ge.f32.partialorder %v45, 1.0
    %vm91 = vcmp.ge.f32.partialorder %v46, 1.0
    %vm92 = vmand %vm82, %vm87
    %vm93 = vmand %vm83, %vm88
    %vm94 = vmand %vm84, %vm89
    %vm95 = vmand %vm85, %vm90
    %vm96 = vmand %vm86, %vm91
    %v97 = vld [vmem:[%s0] sm:$0xff]
    %vm98 = vcmp.gt.f32.partialorder %v97, 0.5
    %v100 = vrot.slane %v97, 2
    %v102 = vadd.f32 %v97, %v100
    %v103 = vmul.f32 %v102, 0.5
    %105 = vset.pattern.permute.xlu0 0
    %106 = vperm.xlu0 %105, %v17
    %v107 = vpop.permute.xlu0 %106
    %110 = vset.pattern.permute.xlu0 0
    %111 = vperm.xlu0 %110, %v18
    %v112 = vpop.permute.xlu0 %111
    %115 = vset.pattern.permute.xlu0 0
    %116 = vperm.xlu0 %115, %v19
    %v117 = vpop.permute.xlu0 %116
    %120 = vset.pattern.permute.xlu0 0
    %121 = vperm.xlu0 %120, %v20
    %v122 = vpop.permute.xlu0 %121
    %125 = vset.pattern.permute.xlu0 0
    %126 = vperm.xlu0 %125, %v21
    %v127 = vpop.permute.xlu0 %126
    %v129 = vlaneseq
    %v130 = vshrl.u32 %v129, 7
    %v131 = vsub.s32 0, %v130
    %v132 = vrot.slane %v103, %v131
    %vm133 = vcmp.lt.f32.partialorder %v107, %v132
    %vm134 = vcmp.lt.f32.partialorder %v112, %v132
    %vm135 = vcmp.lt.f32.partialorder %v117, %v132
    %vm136 = vcmp.lt.f32.partialorder %v122, %v132
    %vm137 = vcmp.lt.f32.partialorder %v127, %v132
    %139 = vset.pattern.permute.xlu0 0
    %140 = vperm.xlu0 %139, %v27
    %v141 = vpop.permute.xlu0 %140
    %144 = vset.pattern.permute.xlu0 0
    %145 = vperm.xlu0 %144, %v28
    %v146 = vpop.permute.xlu0 %145
    %149 = vset.pattern.permute.xlu0 0
    %150 = vperm.xlu0 %149, %v29
    %v151 = vpop.permute.xlu0 %150
    %154 = vset.pattern.permute.xlu0 0
    %155 = vperm.xlu0 %154, %v30
    %v156 = vpop.permute.xlu0 %155
    %159 = vset.pattern.permute.xlu0 0
    %160 = vperm.xlu0 %159, %v31
    %v161 = vpop.permute.xlu0 %160
    %vm163 = vcmp.lt.f32.partialorder %v132, %v141
    %vm164 = vcmp.lt.f32.partialorder %v132, %v146
    %vm165 = vcmp.lt.f32.partialorder %v132, %v151
    %vm166 = vcmp.lt.f32.partialorder %v132, %v156
    %vm167 = vcmp.lt.f32.partialorder %v132, %v161
    %vm168 = vmand %vm133, %vm163
    %vm169 = vmand %vm134, %vm164
    %vm170 = vmand %vm135, %vm165
    %vm171 = vmand %vm136, %vm166
    %vm172 = vmand %vm137, %vm167
    %174 = vset.pattern.permute.xlu0 0
    %175 = vperm.xlu0 %174, %v22
    %v176 = vpop.permute.xlu0 %175
    %179 = vset.pattern.permute.xlu0 0
    %180 = vperm.xlu0 %179, %v23
    %v181 = vpop.permute.xlu0 %180
    %184 = vset.pattern.permute.xlu0 0
    %185 = vperm.xlu0 %184, %v24
    %v186 = vpop.permute.xlu0 %185
    %189 = vset.pattern.permute.xlu0 0
    %190 = vperm.xlu0 %189, %v25
    %v191 = vpop.permute.xlu0 %190
    %194 = vset.pattern.permute.xlu0 0
    %195 = vperm.xlu0 %194, %v26
    %v196 = vpop.permute.xlu0 %195
    %v198 = vlaneseq
    %v199 = vshrl.u32 %v198, 7
    %v200 = vsub.s32 1, %v199
    %v201 = vrot.slane %v103, %v200
    %vm202 = vcmp.lt.f32.partialorder %v176, %v201
    %vm203 = vcmp.lt.f32.partialorder %v181, %v201
    %vm204 = vcmp.lt.f32.partialorder %v186, %v201
    %vm205 = vcmp.lt.f32.partialorder %v191, %v201
    %vm206 = vcmp.lt.f32.partialorder %v196, %v201
    %vm207 = vmand %vm168, %vm202
    %vm208 = vmand %vm169, %vm203
    %vm209 = vmand %vm170, %vm204
    %vm210 = vmand %vm171, %vm205
    %vm211 = vmand %vm172, %vm206
    %213 = vset.pattern.permute.xlu0 0
    %214 = vperm.xlu0 %213, %v32
    %v215 = vpop.permute.xlu0 %214
    %218 = vset.pattern.permute.xlu0 0
    %219 = vperm.xlu0 %218, %v33
    %v220 = vpop.permute.xlu0 %219
    %223 = vset.pattern.permute.xlu0 0
    %224 = vperm.xlu0 %223, %v34
    %v225 = vpop.permute.xlu0 %224
    %228 = vset.pattern.permute.xlu0 0
    %229 = vperm.xlu0 %228, %v35
    %v230 = vpop.permute.xlu0 %229
    %233 = vset.pattern.permute.xlu0 0
    %234 = vperm.xlu0 %233, %v36
    %v235 = vpop.permute.xlu0 %234
    %vm237 = vcmp.lt.f32.partialorder %v201, %v215
    %vm238 = vcmp.lt.f32.partialorder %v201, %v220
    %vm239 = vcmp.lt.f32.partialorder %v201, %v225
    %vm240 = vcmp.lt.f32.partialorder %v201, %v230
    %vm241 = vcmp.lt.f32.partialorder %v201, %v235
    %vm242 = vmand %vm207, %vm237
    %vm243 = vmand %vm208, %vm238
    %vm244 = vmand %vm209, %vm239
    %vm245 = vmand %vm210, %vm240
    %vm246 = vmand %vm211, %vm241
    %v247 = vsel %vm98, 1, 0
    %v248 = vlaneseq
    %v249 = vshrl.u32 %v248, 7
    %v250 = vsub.s32 4, %v249
    %v251 = vrot.slane %v247, %v250
    %vm252 = vcmp.eq.s32.totalorder %v251, 1
    %vm253 = vmand %vm242, %vm252
    %vm254 = vmand %vm243, %vm252
    %vm255 = vmand %vm244, %vm252
    %vm256 = vmand %vm245, %vm252
    %vm257 = vmand %vm246, %vm252
    %v258 = vlaneseq
    %v259 = vshrl.u32 %v258, 7
    %v260 = vsub.s32 2, %v259
    %v261 = vrot.slane %v97, %v260
    %v262 = vmin.f32 %v261, %v141
    %v263 = vmin.f32 %v261, %v146
    %v264 = vmin.f32 %v261, %v151
    %v265 = vmin.f32 %v261, %v156
    %v266 = vmin.f32 %v261, %v161
    %v267 = vlaneseq
    %v268 = vshrl.u32 %v267, 7
    %v269 = vsub.s32 0, %v268
    %v270 = vrot.slane %v97, %v269
    %v271 = vmax.f32 %v270, %v107
    %v272 = vmax.f32 %v270, %v112
    %v273 = vmax.f32 %v270, %v117
    %v274 = vmax.f32 %v270, %v122
    %v275 = vmax.f32 %v270, %v127
    %v276 = vsub.f32 %v262, %v271
    %v277 = vsub.f32 %v263, %v272
    %v278 = vsub.f32 %v264, %v273
    %v279 = vsub.f32 %v265, %v274
    %v280 = vsub.f32 %v266, %v275
    %v281 = vmax.f32 %v276, 0.0
    %v282 = vmax.f32 %v277, 0.0
    %v283 = vmax.f32 %v278, 0.0
    %v284 = vmax.f32 %v279, 0.0
    %v285 = vmax.f32 %v280, 0.0
    %v286 = vlaneseq
    %v287 = vshrl.u32 %v286, 7
    %v288 = vsub.s32 3, %v287
    %v289 = vrot.slane %v97, %v288
    %v290 = vmin.f32 %v289, %v215
    %v291 = vmin.f32 %v289, %v220
    %v292 = vmin.f32 %v289, %v225
    %v293 = vmin.f32 %v289, %v230
    %v294 = vmin.f32 %v289, %v235
    %v295 = vlaneseq
    %v296 = vshrl.u32 %v295, 7
    %v297 = vsub.s32 1, %v296
    %v298 = vrot.slane %v97, %v297
    %v299 = vmax.f32 %v298, %v176
    %v300 = vmax.f32 %v298, %v181
    %v301 = vmax.f32 %v298, %v186
    %v302 = vmax.f32 %v298, %v191
    %v303 = vmax.f32 %v298, %v196
    %v304 = vsub.f32 %v290, %v299
    %v305 = vsub.f32 %v291, %v300
    %v306 = vsub.f32 %v292, %v301
    %v307 = vsub.f32 %v293, %v302
    %v308 = vsub.f32 %v294, %v303
    %v309 = vmax.f32 %v304, 0.0
    %v310 = vmax.f32 %v305, 0.0
    %v311 = vmax.f32 %v306, 0.0
    %v312 = vmax.f32 %v307, 0.0
    %v313 = vmax.f32 %v308, 0.0
    %v314 = vmul.f32 %v281, %v309
    %v315 = vmul.f32 %v282, %v310
    %v316 = vmul.f32 %v283, %v311
    %v317 = vmul.f32 %v284, %v312
    %v318 = vmul.f32 %v285, %v313
    %v319 = vrot.slane %v97, 6
    %v321 = vsub.f32 %v97, %v319
    %v323 = vrot.slane %v321, 1
    %v325 = vmul.f32 %v321, %v323
    %v326 = vlaneseq
    %v327 = vshrl.u32 %v326, 7
    %v328 = vsub.s32 2, %v327
    %v329 = vrot.slane %v325, %v328
    %331 = vset.pattern.permute.xlu0 0
    %332 = vperm.xlu0 %331, %v47
    %v333 = vpop.permute.xlu0 %332
    %336 = vset.pattern.permute.xlu0 0
    %337 = vperm.xlu0 %336, %v48
    %v338 = vpop.permute.xlu0 %337
    %341 = vset.pattern.permute.xlu0 0
    %342 = vperm.xlu0 %341, %v49
    %v343 = vpop.permute.xlu0 %342
    %346 = vset.pattern.permute.xlu0 0
    %347 = vperm.xlu0 %346, %v50
    %v348 = vpop.permute.xlu0 %347
    %351 = vset.pattern.permute.xlu0 0
    %352 = vperm.xlu0 %351, %v51
    %v353 = vpop.permute.xlu0 %352
    %v355 = vadd.f32 %v329, %v333
    %v356 = vadd.f32 %v329, %v338
    %v357 = vadd.f32 %v329, %v343
    %v358 = vadd.f32 %v329, %v348
    %v359 = vadd.f32 %v329, %v353
    %v360 = vsub.f32 %v355, %v314
    %v361 = vsub.f32 %v356, %v315
    %v362 = vsub.f32 %v357, %v316
    %v363 = vsub.f32 %v358, %v317
    %v364 = vsub.f32 %v359, %v318
    %v365 = vstv %s16
    %v366 = vmul.f32 %v365, %v360
    %v367 = vmul.f32 %v365, %v361
    %v368 = vmul.f32 %v365, %v362
    %v369 = vmul.f32 %v365, %v363
    %v370 = vmul.f32 %v365, %v364
    %vm371 = vcmp.ge.f32.partialorder %v314, %v366
    %vm372 = vcmp.ge.f32.partialorder %v315, %v367
    %vm373 = vcmp.ge.f32.partialorder %v316, %v368
    %vm374 = vcmp.ge.f32.partialorder %v317, %v369
    %vm375 = vcmp.ge.f32.partialorder %v318, %v370
    %vm376 = vmand %vm253, %vm371
    %vm377 = vmand %vm254, %vm372
    %vm378 = vmand %vm255, %vm373
    %vm379 = vmand %vm256, %vm374
    %vm380 = vmand %vm257, %vm375
    %v381 = vsel %vm253, 1, 0
    %v382 = vsel %vm254, 1, 0
    %v383 = vsel %vm255, 1, 0
    %v384 = vsel %vm256, 1, 0
    %v385 = vsel %vm257, 1, 0
    %v386 = vcvt.s32.f32 %v381
    %v387 = vcvt.s32.f32 %v382
    %v388 = vcvt.s32.f32 %v383
    %v389 = vcvt.s32.f32 %v384
    %v390 = vcvt.s32.f32 %v385
    %391 = vmax.xlane.f32.xlu0 %v386
    %v392 = vpop.xlane.xlu0 %391
    %393 = vmax.xlane.f32.xlu0 %v387
    %v394 = vpop.xlane.xlu0 %393
    %395 = vmax.xlane.f32.xlu0 %v388
    %v396 = vpop.xlane.xlu0 %395
    %397 = vmax.xlane.f32.xlu0 %v389
    %v398 = vpop.xlane.xlu0 %397
    %399 = vmax.xlane.f32.xlu0 %v390
    %v400 = vpop.xlane.xlu0 %399
    %v401 = vmax.f32 %v392, 0.0
    %v402 = vmax.f32 %v394, 0.0
    %v403 = vmax.f32 %v396, 0.0
    %v404 = vmax.f32 %v398, 0.0
    %v405 = vmax.f32 %v400, 0.0
    %v406 = vsel %vm376, 1, 0
    %v407 = vsel %vm377, 1, 0
    %v408 = vsel %vm378, 1, 0
    %v409 = vsel %vm379, 1, 0
    %v410 = vsel %vm380, 1, 0
    %v411 = vcvt.s32.f32 %v406
    %v412 = vcvt.s32.f32 %v407
    %v413 = vcvt.s32.f32 %v408
    %v414 = vcvt.s32.f32 %v409
    %v415 = vcvt.s32.f32 %v410
    %416 = vmax.xlane.f32.xlu0 %v411
    %v417 = vpop.xlane.xlu0 %416
    %418 = vmax.xlane.f32.xlu0 %v412
    %v419 = vpop.xlane.xlu0 %418
    %420 = vmax.xlane.f32.xlu0 %v413
    %v421 = vpop.xlane.xlu0 %420
    %422 = vmax.xlane.f32.xlu0 %v414
    %v423 = vpop.xlane.xlu0 %422
    %424 = vmax.xlane.f32.xlu0 %v415
    %v425 = vpop.xlane.xlu0 %424
    %v426 = vmax.f32 %v417, 0.0
    %v427 = vmax.f32 %v419, 0.0
    %v428 = vmax.f32 %v421, 0.0
    %v429 = vmax.f32 %v423, 0.0
    %v430 = vmax.f32 %v425, 0.0
    %vm431 = vcmp.gt.f32.partialorder %v401, 0.5
    %vm432 = vcmp.gt.f32.partialorder %v402, 0.5
    %vm433 = vcmp.gt.f32.partialorder %v403, 0.5
    %vm434 = vcmp.gt.f32.partialorder %v404, 0.5
    %vm435 = vcmp.gt.f32.partialorder %v405, 0.5
    %vm436 = vmand %vm92, %vm431
    %vm437 = vmand %vm93, %vm432
    %vm438 = vmand %vm94, %vm433
    %vm439 = vmand %vm95, %vm434
    %vm440 = vmand %vm96, %vm435
    %vm441 = vcmp.gt.f32.partialorder %v426, 0.5
    %vm442 = vcmp.gt.f32.partialorder %v427, 0.5
    %vm443 = vcmp.gt.f32.partialorder %v428, 0.5
    %vm444 = vcmp.gt.f32.partialorder %v429, 0.5
    %vm445 = vcmp.gt.f32.partialorder %v430, 0.5
    %vm446 = vmand %vm436, %vm441
    %vm447 = vmand %vm437, %vm442
    %vm448 = vmand %vm438, %vm443
    %vm449 = vmand %vm439, %vm444
    %vm450 = vmand %vm440, %vm445
    %v451 = vlaneseq
    %v452 = vshrl.u32 %v451, 7
    %v453 = vadd.s32 %v452, 8
    %v454 = vadd.s32 %v452, 16
    %v455 = vadd.s32 %v452, 24
    %v456 = vadd.s32 %v452, 32
    %v457 = vcvt.s32.f32 %v452
    %v458 = vcvt.s32.f32 %v453
    %v459 = vcvt.s32.f32 %v454
    %v460 = vcvt.s32.f32 %v455
    %v461 = vcvt.s32.f32 %v456
    %v462 = vsel %vm446, %v457, 40.0
    %v463 = vsel %vm447, %v458, 40.0
    %v464 = vsel %vm448, %v459, 40.0
    %v465 = vsel %vm449, %v460, 40.0
    %v466 = vsel %vm450, %v461, 40.0
    %vm467 = vcmask 7168
    %v468 = vsel %vm467, %v462, inf
    %v469 = vsel %vm467, %v463, inf
    %v470 = vsel %vm467, %v464, inf
    %v471 = vsel %vm467, %v465, inf
    %v472 = vsel %vm467, %v466, inf
    %v473 = vmin.f32 %v468, %v472
    %v474 = vmin.f32 %v473, %v469
    %v475 = vmin.f32 %v470, %v471
    %v476 = vmin.f32 %v474, %v475
    %v477 = vrot.slane %v476, 4
    %v478 = vmin.f32 %v476, %v477
    %v479 = vrot.slane %v478, 2
    %v480 = vmin.f32 %v478, %v479
    %v481 = vrot.slane %v480, 1
    %v482 = vmin.f32 %v480, %v481
    %vm483 = vcmp.lt.f32.partialorder %v482, 40.0
    %vm484 = vcmp.eq.f32.partialorder %v457, %v482
    %vm485 = vcmp.eq.f32.partialorder %v458, %v482
    %vm486 = vcmp.eq.f32.partialorder %v459, %v482
    %vm487 = vcmp.eq.f32.partialorder %v460, %v482
    %vm488 = vcmp.eq.f32.partialorder %v461, %v482
    %vm489 = vmand %vm484, %vm446
    %vm490 = vmand %vm485, %vm447
    %vm491 = vmand %vm486, %vm448
    %vm492 = vmand %vm487, %vm449
    %vm493 = vmand %vm488, %vm450
    %v494 = vsel %vm489, 1, 0
    %v495 = vsel %vm490, 1, 0
    %v496 = vsel %vm491, 1, 0
    %v497 = vsel %vm492, 1, 0
    %v498 = vsel %vm493, 1, 0
    %v499 = vcvt.s32.f32 %v494
    %v500 = vcvt.s32.f32 %v495
    %v501 = vcvt.s32.f32 %v496
    %v502 = vcvt.s32.f32 %v497
    %v503 = vcvt.s32.f32 %v498
    %v504 = vmul.f32 %v17, %v499
    %v505 = vmul.f32 %v18, %v500
    %v506 = vmul.f32 %v19, %v501
    %v507 = vmul.f32 %v20, %v502
    %v508 = vmul.f32 %v21, %v503
    %v509 = vsel %vm467, %v504, 0.0
    %v510 = vsel %vm467, %v505, 0.0
    %v511 = vadd.f32 %v509, %v510
    %v512 = vsel %vm467, %v506, 0.0
    %v513 = vadd.f32 %v511, %v512
    %v514 = vsel %vm467, %v507, 0.0
    %v515 = vadd.f32 %v513, %v514
    %v516 = vsel %vm467, %v508, 0.0
    %v517 = vadd.f32 %v515, %v516
    %v518 = vrot.slane %v517, 4
    %v519 = vadd.f32 %v517, %v518
    %v520 = vrot.slane %v519, 2
    %v521 = vadd.f32 %v519, %v520
    %v522 = vrot.slane %v521, 1
    %v523 = vadd.f32 %v521, %v522
    %v524 = vmul.f32 %v22, %v499
    %v525 = vmul.f32 %v23, %v500
    %v526 = vmul.f32 %v24, %v501
    %v527 = vmul.f32 %v25, %v502
    %v528 = vmul.f32 %v26, %v503
    %v529 = vsel %vm467, %v524, 0.0
    %v530 = vsel %vm467, %v525, 0.0
    %v531 = vadd.f32 %v529, %v530
    %v532 = vsel %vm467, %v526, 0.0
    %v533 = vadd.f32 %v531, %v532
    %v534 = vsel %vm467, %v527, 0.0
    %v535 = vadd.f32 %v533, %v534
    %v536 = vsel %vm467, %v528, 0.0
    %v537 = vadd.f32 %v535, %v536
    %v538 = vrot.slane %v537, 4
    %v539 = vadd.f32 %v537, %v538
    %v540 = vrot.slane %v539, 2
    %v541 = vadd.f32 %v539, %v540
    %v542 = vrot.slane %v541, 1
    %v543 = vadd.f32 %v541, %v542
    %v544 = vmul.f32 %v27, %v499
    %v545 = vmul.f32 %v28, %v500
    %v546 = vmul.f32 %v29, %v501
    %v547 = vmul.f32 %v30, %v502
    %v548 = vmul.f32 %v31, %v503
    %v549 = vsel %vm467, %v544, 0.0
    %v550 = vsel %vm467, %v545, 0.0
    %v551 = vadd.f32 %v549, %v550
    %v552 = vsel %vm467, %v546, 0.0
    %v553 = vadd.f32 %v551, %v552
    %v554 = vsel %vm467, %v547, 0.0
    %v555 = vadd.f32 %v553, %v554
    %v556 = vsel %vm467, %v548, 0.0
    %v557 = vadd.f32 %v555, %v556
    %v558 = vrot.slane %v557, 4
    %v559 = vadd.f32 %v557, %v558
    %v560 = vrot.slane %v559, 2
    %v561 = vadd.f32 %v559, %v560
    %v562 = vrot.slane %v561, 1
    %v563 = vadd.f32 %v561, %v562
    %v564 = vmul.f32 %v32, %v499
    %v565 = vmul.f32 %v33, %v500
    %v566 = vmul.f32 %v34, %v501
    %v567 = vmul.f32 %v35, %v502
    %v568 = vmul.f32 %v36, %v503
    %v569 = vsel %vm467, %v564, 0.0
    %v570 = vsel %vm467, %v565, 0.0
    %v571 = vadd.f32 %v569, %v570
    %v572 = vsel %vm467, %v566, 0.0
    %v573 = vadd.f32 %v571, %v572
    %v574 = vsel %vm467, %v567, 0.0
    %v575 = vadd.f32 %v573, %v574
    %v576 = vsel %vm467, %v568, 0.0
    %v577 = vadd.f32 %v575, %v576
    %v578 = vrot.slane %v577, 4
    %v579 = vadd.f32 %v577, %v578
    %v580 = vrot.slane %v579, 2
    %v581 = vadd.f32 %v579, %v580
    %v582 = vrot.slane %v581, 1
    %v583 = vadd.f32 %v581, %v582
    %v584 = vsub.f32 %v563, %v523
    %v585 = vsub.f32 %v583, %v543
    %p586 = scmp.lt.f32.partialorder %s16, 1.0
    %s587 = scalar_select %p586, 1, 0
    %v588 = vstv %s587
    %vm589 = vcmp.eq.s32.totalorder %v588, 1
    %vm590 = vmand %vm483, %vm589
    %592 = vset.pattern.permute.xlu0 0
    %593 = vperm.xlu0 %592, %v523
    %v594 = vpop.permute.xlu0 %593
    %vm596 = vcmp.lt.f32.partialorder %v594, %v103
    %598 = vset.pattern.permute.xlu0 0
    %599 = vperm.xlu0 %598, %v563
    %v600 = vpop.permute.xlu0 %599
    %vm602 = vcmp.lt.f32.partialorder %v103, %v600
    %vm603 = vmand %vm596, %vm602
    %605 = vset.pattern.permute.xlu0 0
    %606 = vperm.xlu0 %605, %v543
    %v607 = vpop.permute.xlu0 %606
    %vm609 = vcmp.lt.f32.partialorder %v607, %v103
    %v610 = vsel %vm609, 1, 0
    %v611 = vrot.slane %v610, 1
    %vm612 = vcmp.ne.s32.totalorder %v611, 0
    %vm613 = vmand %vm603, %vm612
    %615 = vset.pattern.permute.xlu0 0
    %616 = vperm.xlu0 %615, %v583
    %v617 = vpop.permute.xlu0 %616
    %vm619 = vcmp.lt.f32.partialorder %v103, %v617
    %v620 = vsel %vm619, 1, 0
    %v621 = vrot.slane %v620, 1
    %vm622 = vcmp.ne.s32.totalorder %v621, 0
    %vm623 = vmand %vm613, %vm622
    %v624 = vrot.slane %v247, 4
    %vm625 = vcmp.ne.s32.totalorder %v624, 0
    %vm626 = vmand %vm623, %vm625
    %v627 = vsel %vm626, 1, 0
    %v628 = vcvt.s32.f32 %v627
    %v629 = vsub.f32 %v97, %v594
    %v630 = vmax.f32 %v629, 0.0
    %632 = vset.pattern.permute.xlu0 0
    %633 = vperm.xlu0 %632, %v584
    %v634 = vpop.permute.xlu0 %633
    %v636 = vmin.f32 %v634, %v630
    %v637 = vsub.f32 %v97, %v607
    %v638 = vmax.f32 %v637, 0.0
    %640 = vset.pattern.permute.xlu0 0
    %641 = vperm.xlu0 %640, %v585
    %v642 = vpop.permute.xlu0 %641
    %v644 = vmin.f32 %v642, %v638
    %v645 = vsel %vm590, 1, 0
    %646 = vset.pattern.permute.xlu0 0
    %647 = vperm.xlu0 %646, %v645
    %v648 = vpop.permute.xlu0 %647
    %vm649 = vcmp.eq.s32.totalorder %v648, 1
    %v650 = vsel %vm649, %v636, %v97
    %651 = vst [vmem:[#allocation3] sm:$0x1] %v650
    %v652 = vsel %vm649, %v644, %v97
    %653 = vst [vmem:[#allocation3] sm:$0x2] %v652
    %654 = vst [vmem:[#allocation3] sm:$0x4] %v650
    %655 = vst [vmem:[#allocation3] sm:$0x8] %v652
    %v656 = vrot.slane %v97, 4
    %v658 = vsel %vm649, %v628, %v656
    %659 = vst [vmem:[#allocation3 + $0x4] sm:$0x1] %v658
    %v660 = vsel %vm649, 1.0, 0.0
    %661 = vst [vmem:[#allocation3 + $0x5] sm:$0x1] %v660
    %v662 = vsel %vm590, %v523, 0.0
    %v663 = vsel %vm590, %v543, 0.0
    %v664 = vsel %vm590, %v563, 16.0
    %v665 = vsel %vm590, %v583, 16.0
    %v666 = vlaneseq
    %v667 = vand.u32 %v666, 127
    %vm668 = vcmp.eq.s32.totalorder %v667, 0
    %670 = vset.pattern.permute.xlu0 0
    %671 = vperm.xlu0 %670, %v662
    %v672 = vpop.permute.xlu0 %671
    %v674 = vsel %vm668, %v672, 0.0
    %vm675 = vcmp.eq.s32.totalorder %v667, 1
    %677 = vset.pattern.permute.xlu0 0
    %678 = vperm.xlu0 %677, %v663
    %v679 = vpop.permute.xlu0 %678
    %v681 = vsel %vm675, %v679, 0.0
    %v682 = vadd.f32 %v674, %v681
    %vm683 = vcmp.eq.s32.totalorder %v667, 2
    %685 = vset.pattern.permute.xlu0 0
    %686 = vperm.xlu0 %685, %v664
    %v687 = vpop.permute.xlu0 %686
    %v689 = vsel %vm683, %v687, 0.0
    %v690 = vadd.f32 %v682, %v689
    %vm691 = vcmp.eq.s32.totalorder %v667, 3
    %693 = vset.pattern.permute.xlu0 0
    %694 = vperm.xlu0 %693, %v665
    %v695 = vpop.permute.xlu0 %694
    %v697 = vsel %vm691, %v695, 0.0
    %v698 = vadd.f32 %v690, %v697
    %699 = vst [vmem:[#allocation3 + $0x6] sm:$0x1] %v698
    %700 = vst [vmem:[#allocation3 + $0x7] sm:$0x1] 0.0
    // Predicated region
    $region14: #{tpu_custom_call.1} parent=1 // pred_check
      _
    $region15: #{tpu_custom_call.1} parent=1 // pred_check_branch
      %702 = sbr.rel (0) target = $region17
    $region16: #{tpu_custom_call.1} parent=1 // pred_region
      %s704 = ssub.s32 128, 128
      %705 = vsyncadd [#allocation4], %s704
      %s707 = sshll.u32 [#allocation3], 4
      %s708 = int_to_ptr.vmem [resolvable:$true] %s707
      %710 = dma.vmem_to_hbm [thread:$0]  %s708, 128, %s3, [#allocation4]
    $region17: #{tpu_custom_call.1} parent=1 // pred_fallthru
      _
    // Predicated region
    $region18: #{tpu_custom_call.1} parent=1 // pred_check
      _
    $region19: #{tpu_custom_call.1} parent=1 // pred_check_branch
      %712 = sbr.rel (0) target = $region21
    $region20: #{tpu_custom_call.1} parent=1 // pred_region
      %713 = dma.done [#allocation4], 128
    $region21: #{tpu_custom_call.1} parent=1 // pred_fallthru
      _
    %714 = vsyncpa [#allocation4], 1

</llo_original>
